<compile_context>
chip_gen: v5e
topology: v5e:2x2
jax: 0.10.0
libtpu: 0.0.40
codegen_flags: <defaults>
</compile_context>

<pallas_src>
import functools
from typing import Dict

import jax
import jax.numpy as jnp
import numpy as np
from jax.experimental import pallas as pl
from jax.experimental.pallas import tpu as pltpu


def _hadamard_matrix(n_bits: int) -> np.ndarray:
    """Sylvester-ordered Walsh-Hadamard matrix, entries +/-1 (exact in f32/bf16)."""
    h = np.array([[1.0]], dtype=np.float32)
    for _ in range(n_bits):
        h = np.block([[h, h], [h, -h]])
    return h


def _vmem_capacity_bytes() -> int:
    try:
        info = pltpu.get_tpu_info()
        cap = getattr(info, "vmem_capacity_bytes", None)
        if cap:
            return int(cap)
    except Exception:
        pass
    return 64 * 1024 * 1024  # pessimistic: v7x per-TensorCore VMEM


def _choose_tiling(rows: int, bytes_per_row: int, fixed_bytes: int, vmem_cap: int):
    """Largest batch tile that fits ~45% of VMEM; pad rather than fall back to tiny tiles."""
    budget = int(0.45 * vmem_cap) - fixed_bytes
    budget = max(budget, 8 * bytes_per_row)
    cap = max(8, budget // bytes_per_row)
    cap = int(min(cap, rows, 2048))
    if rows <= cap:
        # Whole batch fits one tile: split in two when possible so the
        # "parallel" grid axis actually shards over v7x's 2 TensorCores.
        if rows >= 16 and rows % 16 == 0:
            return rows // 2, rows
        return rows, rows
    # Largest multiple-of-8 divisor of rows that fits the budget.
    best = 0
    t = (cap // 8) * 8
    while t >= 8:
        if rows % t == 0:
            best = t
            break
        t -= 8
    if best >= max(64, cap // 2):
        return best, rows
    # Divisors are all tiny (e.g. rows=1000): pad the batch instead.
    tile = max(8, (cap // 8) * 8)
    padded = ((rows + tile - 1) // tile) * tile
    return tile, padded


def _group_recombine_kernel(*refs, n_keys, n_masked, beta_idx, masked_idx,
                            length, has_e, dot_dtype):
    """Fused per-key log_softmax + boolean (WHT) recombination of every masked key."""
    leak_refs = refs[:n_keys]
    h_ref = refs[n_keys]
    off = n_keys + 1
    e_ref = None
    if has_e:
        e_ref = refs[off]
        off += 1
    logp_refs = refs[off:off + n_keys]
    tgt_refs = refs[off + n_keys:off + n_keys + n_masked]

    h = h_ref[...].astype(dot_dtype)          # kron(I_g, H), +/-1 entries
    e = e_ref[...] if has_e else None         # kron(I_g, ones(L,L)) block indicator

    def block_log_softmax(x):
        # Row-global max is an exact stabiliser for per-block log_softmax.
        m = jnp.max(x, axis=-1, keepdims=True)
        ex = jnp.exp(x - m)
        if has_e:
            # Per-L-block sum broadcast back to every lane, via one MXU matmul.
            s = jnp.dot(ex, e, preferred_element_type=jnp.float32)
        else:
            s = jnp.sum(ex, axis=-1, keepdims=True)
        return x - m - jnp.log(s)

    # ---- pass 1: every log_softmax output + WH-domain product of the betas ----
    bp = None
    for i in range(n_keys):
        x = leak_refs[i][...]                                     # (tile, g*L) f32
        logp_refs[i][...] = block_log_softmax(x)
        if i in beta_idx:
            xw = jnp.dot(x.astype(dot_dtype), h,
                         preferred_element_type=jnp.float32)      # forward WHT
            bp = xw if bp is None else bp * xw
    bp = bp * (1.0 / length)   # fold 1/L once into the single (tile, g*L) product

    # ---- pass 2: each masked key -> multiply in WH domain, inverse WHT, log_softmax ----
    for j, mi in enumerate(masked_idx):
        xw = jnp.dot(leak_refs[mi][...].astype(dot_dtype), h,
                     preferred_element_type=jnp.float32)
        res = jnp.dot((bp * xw).astype(dot_dtype), h,
                      preferred_element_type=jnp.float32)
        tgt_refs[j][...] = block_log_softmax(res)


def group_recombine_forward(leakages: Dict[str, jnp.ndarray],
                            n_bits: int,
                            scheme: str = "boolean",
                            normalize_probs: bool = False,
                            dot_dtype=jnp.float32,
                            tile_rows=None) -> Dict[str, jnp.ndarray]:
    """GroupRecombine.forward (scheme='boolean', normalize_probs=False)."""
    if scheme != "boolean":
        # TODO(synk): 'arithmetical'/'multiplicative' (FFT / log-table) schemes.
        raise NotImplementedError("only scheme='boolean' is implemented")
    if normalize_probs:
        # TODO(synk): normalize_probs=True (softmax + clip + log) path.
        raise NotImplementedError("normalize_probs=True is not implemented")

    keys = list(leakages.keys())                     # dict insertion order (torch order)
    beta_keys = [k for k in keys if "beta" in k]
    masked_keys = [k for k in keys if "masked" in k]
    assert beta_keys, "need at least one 'beta_*' leakage"
    assert masked_keys, "need at least one 'masked_*' leakage"
    beta_idx = tuple(keys.index(k) for k in beta_keys)
    masked_idx = tuple(keys.index(k) for k in masked_keys)
    n_keys, n_masked = len(keys), len(masked_keys)

    batch, length = leakages[keys[0]].shape
    assert length == (1 << n_bits)

    # ---- lane-dense packing for small L: g batch rows per 128-lane row --------
    g = 1
    if length < 128:
        g = 128 // length
        while g > 1 and batch % g:
            g //= 2
    rows = batch // g
    gl = g * length

    h_np = _hadamard_matrix(n_bits)
    hg = jnp.asarray(np.kron(np.eye(g, dtype=np.float32), h_np))
    has_e = g > 1
    mats = [hg]
    if has_e:
        e_np = np.kron(np.eye(g, dtype=np.float32),
                       np.ones((length, length), dtype=np.float32))
        mats.append(jnp.asarray(e_np))

    # ---- VMEM-budgeted tiling + explicit scoped-VMEM limit ---------------------
    n_temp = 8  # live (tile, g*L) f32 temporaries (x, exp, s, logp, xw, bp, pw, res)
    bytes_per_row = 4 * gl * (2 * n_keys + 2 * (n_keys + n_masked) + n_temp)
    fixed_bytes = len(mats) * 2 * gl * gl * 4       # double-buffered resident matrices
    vmem_cap = _vmem_capacity_bytes()
    if tile_rows is None:
        tile_rows, padded_rows = _choose_tiling(rows, bytes_per_row, fixed_bytes, vmem_cap)
    else:
        padded_rows = ((rows + tile_rows - 1) // tile_rows) * tile_rows
    need = fixed_bytes + tile_rows * bytes_per_row + (4 << 20)
    vmem_limit = int(min(int(0.92 * vmem_cap), max(need, 16 << 20)))

    packed = [leakages[k].reshape(rows, gl) for k in keys]   # free (contiguous) reshape
    if padded_rows != rows:
        pad = padded_rows - rows
        packed = [jnp.pad(p, ((0, pad), (0, 0))) for p in packed]

    grid = (padded_rows // tile_rows,)

    row_spec = pl.BlockSpec((tile_rows, gl), lambda b: (b, 0))
    mat_spec = pl.BlockSpec((gl, gl), lambda b: (0, 0))      # resident weights

    kernel = functools.partial(
        _group_recombine_kernel,
        n_keys=n_keys, n_masked=n_masked,
        beta_idx=beta_idx, masked_idx=masked_idx,
        length=length, has_e=has_e, dot_dtype=dot_dtype)

    n_dots = len(beta_idx) + 2 * n_masked + ((n_keys + n_masked) if has_e else 0)
    cost = pl.CostEstimate(
        flops=int(2 * gl * gl * padded_rows * n_dots),
        transcendentals=int((n_keys + n_masked) * padded_rows * gl),
        bytes_accessed=int(4 * padded_rows * gl * (2 * n_keys + n_masked)
                           + sum(int(m.size) * 4 for m in mats)))

    outs = pl.pallas_call(
        kernel,
        grid=grid,
        out_shape=tuple(jax.ShapeDtypeStruct((padded_rows, gl), jnp.float32)
                        for _ in range(n_keys + n_masked)),
        in_specs=[row_spec] * n_keys + [mat_spec] * len(mats),
        out_specs=tuple(row_spec for _ in range(n_keys + n_masked)),
        compiler_params=pltpu.CompilerParams(
            dimension_semantics=("parallel",),
            vmem_limit_bytes=vmem_limit),
        cost_estimate=cost,
    )(*packed, *mats)

    def unpack(o):
        if padded_rows != rows:
            o = o[:rows]
        return o.reshape(batch, length)

    log_probas = {k: unpack(outs[i]) for i, k in enumerate(keys)}
    for j, mk in enumerate(masked_keys):
        log_probas["target_" + mk.split("_")[1]] = unpack(outs[n_keys + j])
    return log_probas


def _group_recombine_reference(leakages: Dict[str, jnp.ndarray],
                               n_bits: int) -> Dict[str, jnp.ndarray]:
    """Pure-JAX reference mirroring the PyTorch forward (boolean scheme)."""
    length = 1 << n_bits
    h = jnp.asarray(_hadamard_matrix(n_bits))
    hi = jax.lax.Precision.HIGHEST
    log_probas = {k: jax.nn.log_softmax(v, axis=-1) for k, v in leakages.items()}
    p_beta = jnp.stack([v for k, v in leakages.items() if "beta" in k], axis=1)
    for k, v in leakages.items():
        if "masked" not in k:
            continue
        cat = jnp.concatenate([p_beta, v[:, None, :]], axis=1)        # (B, S, L)
        cat_wh = jnp.einsum("bsl,lm->bsm", cat, h, precision=hi)
        prod = jnp.prod(cat_wh, axis=1)
        res = jnp.dot(prod, h, precision=hi) / length
        log_probas["target_" + k.split("_")[1]] = jax.nn.log_softmax(res, axis=-1)
    return log_probas


if __name__ == "__main__":
    n_bits = 4                        # small: 2**4 = 16 classes  (L < 128 -> packed path)
    length = 1 << n_bits
    batch = 64
    key_names = ["beta_0", "beta_1", "masked_sbox", "masked_key"]

    root = jax.random.PRNGKey(0)
    ks = jax.random.split(root, len(key_names))
    leakages = {name: jax.random.normal(k, (batch, length), jnp.float32)
                for name, k in zip(key_names, ks)}

    # f32 MXU operands (default): strict check against the torch-equivalent reference.
    out = group_recombine_forward(leakages, n_bits=n_bits)
    out = jax.tree_util.tree_map(jax.block_until_ready, out)

    ref = _group_recombine_reference(leakages, n_bits)
    assert set(out.keys()) == set(ref.keys())
    for k in ref:
        assert out[k].shape == (batch, length), k
        row_sum = jnp.sum(jnp.exp(out[k]), axis=-1)
        assert bool(jnp.all(jnp.abs(row_sum - 1.0) < 1e-4)), k
        assert bool(jnp.allclose(out[k], ref[k], atol=2e-3, rtol=2e-3)), k

    # bf16 MXU operand variant (v6e/v7x throughput option): validate it runs and
    # produces finite, self-normalised log-probability rows.
    out_bf16 = group_recombine_forward(leakages, n_bits=n_bits, dot_dtype=jnp.bfloat16)
    out_bf16 = jax.tree_util.tree_map(jax.block_until_ready, out_bf16)
    for k, v in out_bf16.items():
        assert v.shape == (batch, length), k
        assert bool(jnp.all(jnp.isfinite(v))), k
        assert bool(jnp.all(jnp.abs(jnp.sum(jnp.exp(v), axis=-1) - 1.0) < 1e-2)), k

    print("KERNEL_OK")
</pallas_src>

<mosaic_0001>
module attributes {stable_mosaic.version = 11 : i64} {
  func.func @_group_recombine_kernel(%arg0: i32, %arg1: memref<8x128xf32, #tpu.memory_space<vmem>>, %arg2: memref<8x128xf32, #tpu.memory_space<vmem>>, %arg3: memref<8x128xf32, #tpu.memory_space<vmem>>, %arg4: memref<8x128xf32, #tpu.memory_space<vmem>>, %arg5: memref<128x128xf32, #tpu.memory_space<vmem>>, %arg6: memref<128x128xf32, #tpu.memory_space<vmem>>, %arg7: memref<8x128xf32, #tpu.memory_space<vmem>>, %arg8: memref<8x128xf32, #tpu.memory_space<vmem>>, %arg9: memref<8x128xf32, #tpu.memory_space<vmem>>, %arg10: memref<8x128xf32, #tpu.memory_space<vmem>>, %arg11: memref<8x128xf32, #tpu.memory_space<vmem>>, %arg12: memref<8x128xf32, #tpu.memory_space<vmem>>) attributes {dimension_semantics = [#tpu.dimension_semantics<parallel>], iteration_bounds = array<i64: 1>, scalar_prefetch = 0 : i64, scratch_operands = 0 : i64, tpu.core_type = #tpu.core_type<tc>, window_params = [{transform_indices = @transform_0, window_bounds = array<i64: 8, 128>}, {transform_indices = @transform_1, window_bounds = array<i64: 8, 128>}, {transform_indices = @transform_2, window_bounds = array<i64: 8, 128>}, {transform_indices = @transform_3, window_bounds = array<i64: 8, 128>}, {pipeline_mode = #tpu.pipeline_mode<synchronous>, transform_indices = @transform_4, window_bounds = array<i64: 128, 128>}, {pipeline_mode = #tpu.pipeline_mode<synchronous>, transform_indices = @transform_5, window_bounds = array<i64: 128, 128>}, {transform_indices = @transform_6, window_bounds = array<i64: 8, 128>}, {transform_indices = @transform_7, window_bounds = array<i64: 8, 128>}, {transform_indices = @transform_8, window_bounds = array<i64: 8, 128>}, {transform_indices = @transform_9, window_bounds = array<i64: 8, 128>}, {transform_indices = @transform_10, window_bounds = array<i64: 8, 128>}, {transform_indices = @transform_11, window_bounds = array<i64: 8, 128>}]} {
    %c0 = arith.constant 0 : index
    %c0_0 = arith.constant 0 : index
    %0 = vector.load %arg5[%c0, %c0_0] : memref<128x128xf32, #tpu.memory_space<vmem>>, vector<128x128xf32>
    %c0_1 = arith.constant 0 : index
    %c0_2 = arith.constant 0 : index
    %1 = vector.load %arg6[%c0_1, %c0_2] : memref<128x128xf32, #tpu.memory_space<vmem>>, vector<128x128xf32>
    %c0_3 = arith.constant 0 : index
    %c0_4 = arith.constant 0 : index
    %2 = vector.load %arg1[%c0_3, %c0_4] : memref<8x128xf32, #tpu.memory_space<vmem>>, vector<8x128xf32>
    %cst = arith.constant dense<0xFF800000> : vector<8xf32>
    %3 = vector.multi_reduction <maximumf>, %2, %cst [1] : vector<8x128xf32> to vector<8xf32>
    %4 = vector.shape_cast %3 : vector<8xf32> to vector<8x1xf32>
    %5 = vector.broadcast %4 : vector<8x1xf32> to vector<8x128xf32>
    %6 = arith.subf %2, %5 : vector<8x128xf32>
    %7 = math.exp %6 : vector<8x128xf32>
    %cst_5 = arith.constant dense<0.000000e+00> : vector<8x128xf32>
    %8 = tpu.matmul %7, %1, %cst_5 {dimension_numbers = #tpu.dot_dimension_numbers<[1], [0], [0], [1], [0, 0, 1, 1], [], []>} : vector<8x128xf32>, vector<128x128xf32>, vector<8x128xf32> -> vector<8x128xf32>
    %9 = vector.broadcast %4 : vector<8x1xf32> to vector<8x128xf32>
    %10 = arith.subf %2, %9 : vector<8x128xf32>
    %11 = math.log %8 : vector<8x128xf32>
    %12 = arith.subf %10, %11 : vector<8x128xf32>
    %c0_6 = arith.constant 0 : index
    %c0_7 = arith.constant 0 : index
    %13 = vector.load %arg7[%c0_6, %c0_7] : memref<8x128xf32, #tpu.memory_space<vmem>>, vector<8x128xf32>
    tpu.vector_store %arg7[%c0_6, %c0_7], %12 {strides = array<i32>} : memref<8x128xf32, #tpu.memory_space<vmem>>, vector<8x128xf32>,
    %cst_8 = arith.constant dense<0.000000e+00> : vector<8x128xf32>
    %14 = tpu.matmul %2, %0, %cst_8 {dimension_numbers = #tpu.dot_dimension_numbers<[1], [0], [0], [1], [0, 0, 1, 1], [], []>} : vector<8x128xf32>, vector<128x128xf32>, vector<8x128xf32> -> vector<8x128xf32>
    %c0_9 = arith.constant 0 : index
    %c0_10 = arith.constant 0 : index
    %15 = vector.load %arg2[%c0_9, %c0_10] : memref<8x128xf32, #tpu.memory_space<vmem>>, vector<8x128xf32>
    %cst_11 = arith.constant dense<0xFF800000> : vector<8xf32>
    %16 = vector.multi_reduction <maximumf>, %15, %cst_11 [1] : vector<8x128xf32> to vector<8xf32>
    %17 = vector.shape_cast %16 : vector<8xf32> to vector<8x1xf32>
    %18 = vector.broadcast %17 : vector<8x1xf32> to vector<8x128xf32>
    %19 = arith.subf %15, %18 : vector<8x128xf32>
    %20 = math.exp %19 : vector<8x128xf32>
    %cst_12 = arith.constant dense<0.000000e+00> : vector<8x128xf32>
    %21 = tpu.matmul %20, %1, %cst_12 {dimension_numbers = #tpu.dot_dimension_numbers<[1], [0], [0], [1], [0, 0, 1, 1], [], []>} : vector<8x128xf32>, vector<128x128xf32>, vector<8x128xf32> -> vector<8x128xf32>
    %22 = vector.broadcast %17 : vector<8x1xf32> to vector<8x128xf32>
    %23 = arith.subf %15, %22 : vector<8x128xf32>
    %24 = math.log %21 : vector<8x128xf32>
    %25 = arith.subf %23, %24 : vector<8x128xf32>
    %c0_13 = arith.constant 0 : index
    %c0_14 = arith.constant 0 : index
    %26 = vector.load %arg8[%c0_13, %c0_14] : memref<8x128xf32, #tpu.memory_space<vmem>>, vector<8x128xf32>
    tpu.vector_store %arg8[%c0_13, %c0_14], %25 {strides = array<i32>} : memref<8x128xf32, #tpu.memory_space<vmem>>, vector<8x128xf32>,
    %cst_15 = arith.constant dense<0.000000e+00> : vector<8x128xf32>
    %27 = tpu.matmul %15, %0, %cst_15 {dimension_numbers = #tpu.dot_dimension_numbers<[1], [0], [0], [1], [0, 0, 1, 1], [], []>} : vector<8x128xf32>, vector<128x128xf32>, vector<8x128xf32> -> vector<8x128xf32>
    %28 = arith.mulf %14, %27 : vector<8x128xf32>
    %c0_16 = arith.constant 0 : index
    %c0_17 = arith.constant 0 : index
    %29 = vector.load %arg3[%c0_16, %c0_17] : memref<8x128xf32, #tpu.memory_space<vmem>>, vector<8x128xf32>
    %cst_18 = arith.constant dense<0xFF800000> : vector<8xf32>
    %30 = vector.multi_reduction <maximumf>, %29, %cst_18 [1] : vector<8x128xf32> to vector<8xf32>
    %31 = vector.shape_cast %30 : vector<8xf32> to vector<8x1xf32>
    %32 = vector.broadcast %31 : vector<8x1xf32> to vector<8x128xf32>
    %33 = arith.subf %29, %32 : vector<8x128xf32>
    %34 = math.exp %33 : vector<8x128xf32>
    %cst_19 = arith.constant dense<0.000000e+00> : vector<8x128xf32>
    %35 = tpu.matmul %34, %1, %cst_19 {dimension_numbers = #tpu.dot_dimension_numbers<[1], [0], [0], [1], [0, 0, 1, 1], [], []>} : vector<8x128xf32>, vector<128x128xf32>, vector<8x128xf32> -> vector<8x128xf32>
    %36 = vector.broadcast %31 : vector<8x1xf32> to vector<8x128xf32>
    %37 = arith.subf %29, %36 : vector<8x128xf32>
    %38 = math.log %35 : vector<8x128xf32>
    %39 = arith.subf %37, %38 : vector<8x128xf32>
    %c0_20 = arith.constant 0 : index
    %c0_21 = arith.constant 0 : index
    %40 = vector.load %arg9[%c0_20, %c0_21] : memref<8x128xf32, #tpu.memory_space<vmem>>, vector<8x128xf32>
    tpu.vector_store %arg9[%c0_20, %c0_21], %39 {strides = array<i32>} : memref<8x128xf32, #tpu.memory_space<vmem>>, vector<8x128xf32>,
    %c0_22 = arith.constant 0 : index
    %c0_23 = arith.constant 0 : index
    %41 = vector.load %arg4[%c0_22, %c0_23] : memref<8x128xf32, #tpu.memory_space<vmem>>, vector<8x128xf32>
    %cst_24 = arith.constant dense<0xFF800000> : vector<8xf32>
    %42 = vector.multi_reduction <maximumf>, %41, %cst_24 [1] : vector<8x128xf32> to vector<8xf32>
    %43 = vector.shape_cast %42 : vector<8xf32> to vector<8x1xf32>
    %44 = vector.broadcast %43 : vector<8x1xf32> to vector<8x128xf32>
    %45 = arith.subf %41, %44 : vector<8x128xf32>
    %46 = math.exp %45 : vector<8x128xf32>
    %cst_25 = arith.constant dense<0.000000e+00> : vector<8x128xf32>
    %47 = tpu.matmul %46, %1, %cst_25 {dimension_numbers = #tpu.dot_dimension_numbers<[1], [0], [0], [1], [0, 0, 1, 1], [], []>} : vector<8x128xf32>, vector<128x128xf32>, vector<8x128xf32> -> vector<8x128xf32>
    %48 = vector.broadcast %43 : vector<8x1xf32> to vector<8x128xf32>
    %49 = arith.subf %41, %48 : vector<8x128xf32>
    %50 = math.log %47 : vector<8x128xf32>
    %51 = arith.subf %49, %50 : vector<8x128xf32>
    %c0_26 = arith.constant 0 : index
    %c0_27 = arith.constant 0 : index
    %52 = vector.load %arg10[%c0_26, %c0_27] : memref<8x128xf32, #tpu.memory_space<vmem>>, vector<8x128xf32>
    tpu.vector_store %arg10[%c0_26, %c0_27], %51 {strides = array<i32>} : memref<8x128xf32, #tpu.memory_space<vmem>>, vector<8x128xf32>,
    %cst_28 = arith.constant 6.250000e-02 : f32
    %53 = vector.broadcast %cst_28 : f32 to vector<8x128xf32>
    %54 = arith.mulf %28, %53 : vector<8x128xf32>
    %c0_29 = arith.constant 0 : index
    %c0_30 = arith.constant 0 : index
    %55 = vector.load %arg3[%c0_29, %c0_30] : memref<8x128xf32, #tpu.memory_space<vmem>>, vector<8x128xf32>
    %cst_31 = arith.constant dense<0.000000e+00> : vector<8x128xf32>
    %56 = tpu.matmul %55, %0, %cst_31 {dimension_numbers = #tpu.dot_dimension_numbers<[1], [0], [0], [1], [0, 0, 1, 1], [], []>} : vector<8x128xf32>, vector<128x128xf32>, vector<8x128xf32> -> vector<8x128xf32>
    %57 = arith.mulf %54, %56 : vector<8x128xf32>
    %cst_32 = arith.constant dense<0.000000e+00> : vector<8x128xf32>
    %58 = tpu.matmul %57, %0, %cst_32 {dimension_numbers = #tpu.dot_dimension_numbers<[1], [0], [0], [1], [0, 0, 1, 1], [], []>} : vector<8x128xf32>, vector<128x128xf32>, vector<8x128xf32> -> vector<8x128xf32>
    %cst_33 = arith.constant dense<0xFF800000> : vector<8xf32>
    %59 = vector.multi_reduction <maximumf>, %58, %cst_33 [1] : vector<8x128xf32> to vector<8xf32>
    %60 = vector.shape_cast %59 : vector<8xf32> to vector<8x1xf32>
    %61 = vector.broadcast %60 : vector<8x1xf32> to vector<8x128xf32>
    %62 = arith.subf %58, %61 : vector<8x128xf32>
    %63 = math.exp %62 : vector<8x128xf32>
    %cst_34 = arith.constant dense<0.000000e+00> : vector<8x128xf32>
    %64 = tpu.matmul %63, %1, %cst_34 {dimension_numbers = #tpu.dot_dimension_numbers<[1], [0], [0], [1], [0, 0, 1, 1], [], []>} : vector<8x128xf32>, vector<128x128xf32>, vector<8x128xf32> -> vector<8x128xf32>
    %65 = vector.broadcast %60 : vector<8x1xf32> to vector<8x128xf32>
    %66 = arith.subf %58, %65 : vector<8x128xf32>
    %67 = math.log %64 : vector<8x128xf32>
    %68 = arith.subf %66, %67 : vector<8x128xf32>
    %c0_35 = arith.constant 0 : index
    %c0_36 = arith.constant 0 : index
    %69 = vector.load %arg11[%c0_35, %c0_36] : memref<8x128xf32, #tpu.memory_space<vmem>>, vector<8x128xf32>
    tpu.vector_store %arg11[%c0_35, %c0_36], %68 {strides = array<i32>} : memref<8x128xf32, #tpu.memory_space<vmem>>, vector<8x128xf32>,
    %c0_37 = arith.constant 0 : index
    %c0_38 = arith.constant 0 : index
    %70 = vector.load %arg4[%c0_37, %c0_38] : memref<8x128xf32, #tpu.memory_space<vmem>>, vector<8x128xf32>
    %cst_39 = arith.constant dense<0.000000e+00> : vector<8x128xf32>
    %71 = tpu.matmul %70, %0, %cst_39 {dimension_numbers = #tpu.dot_dimension_numbers<[1], [0], [0], [1], [0, 0, 1, 1], [], []>} : vector<8x128xf32>, vector<128x128xf32>, vector<8x128xf32> -> vector<8x128xf32>
    %72 = arith.mulf %54, %71 : vector<8x128xf32>
    %cst_40 = arith.constant dense<0.000000e+00> : vector<8x128xf32>
    %73 = tpu.matmul %72, %0, %cst_40 {dimension_numbers = #tpu.dot_dimension_numbers<[1], [0], [0], [1], [0, 0, 1, 1], [], []>} : vector<8x128xf32>, vector<128x128xf32>, vector<8x128xf32> -> vector<8x128xf32>
    %cst_41 = arith.constant dense<0xFF800000> : vector<8xf32>
    %74 = vector.multi_reduction <maximumf>, %73, %cst_41 [1] : vector<8x128xf32> to vector<8xf32>
    %75 = vector.shape_cast %74 : vector<8xf32> to vector<8x1xf32>
    %76 = vector.broadcast %75 : vector<8x1xf32> to vector<8x128xf32>
    %77 = arith.subf %73, %76 : vector<8x128xf32>
    %78 = math.exp %77 : vector<8x128xf32>
    %cst_42 = arith.constant dense<0.000000e+00> : vector<8x128xf32>
    %79 = tpu.matmul %78, %1, %cst_42 {dimension_numbers = #tpu.dot_dimension_numbers<[1], [0], [0], [1], [0, 0, 1, 1], [], []>} : vector<8x128xf32>, vector<128x128xf32>, vector<8x128xf32> -> vector<8x128xf32>
    %80 = vector.broadcast %75 : vector<8x1xf32> to vector<8x128xf32>
    %81 = arith.subf %73, %80 : vector<8x128xf32>
    %82 = math.log %79 : vector<8x128xf32>
    %83 = arith.subf %81, %82 : vector<8x128xf32>
    %c0_43 = arith.constant 0 : index
    %c0_44 = arith.constant 0 : index
    %84 = vector.load %arg12[%c0_43, %c0_44] : memref<8x128xf32, #tpu.memory_space<vmem>>, vector<8x128xf32>
    tpu.vector_store %arg12[%c0_43, %c0_44], %83 {strides = array<i32>} : memref<8x128xf32, #tpu.memory_space<vmem>>, vector<8x128xf32>,
    return
  }
  func.func @transform_0(%arg0: i32) -> (i32, i32) {
    %c0_i32 = arith.constant 0 : i32
    %c0_i32_0 = arith.constant 0 : i32
    return %arg0, %c0_i32 : i32, i32
  }
  func.func @transform_1(%arg0: i32) -> (i32, i32) {
    %c0_i32 = arith.constant 0 : i32
    %c0_i32_0 = arith.constant 0 : i32
    return %arg0, %c0_i32 : i32, i32
  }
  func.func @transform_2(%arg0: i32) -> (i32, i32) {
    %c0_i32 = arith.constant 0 : i32
    %c0_i32_0 = arith.constant 0 : i32
    return %arg0, %c0_i32 : i32, i32
  }
  func.func @transform_3(%arg0: i32) -> (i32, i32) {
    %c0_i32 = arith.constant 0 : i32
    %c0_i32_0 = arith.constant 0 : i32
    return %arg0, %c0_i32 : i32, i32
  }
  func.func @transform_4(%arg0: i32) -> (i32, i32) {
    %c0_i32 = arith.constant 0 : i32
    %c0_i32_0 = arith.constant 0 : i32
    %c0_i32_1 = arith.constant 0 : i32
    return %c0_i32, %c0_i32_0 : i32, i32
  }
  func.func @transform_5(%arg0: i32) -> (i32, i32) {
    %c0_i32 = arith.constant 0 : i32
    %c0_i32_0 = arith.constant 0 : i32
    %c0_i32_1 = arith.constant 0 : i32
    return %c0_i32, %c0_i32_0 : i32, i32
  }
  func.func @transform_6(%arg0: i32) -> (i32, i32) {
    %c0_i32 = arith.constant 0 : i32
    %c0_i32_0 = arith.constant 0 : i32
    return %arg0, %c0_i32 : i32, i32
  }
  func.func @transform_7(%arg0: i32) -> (i32, i32) {
    %c0_i32 = arith.constant 0 : i32
    %c0_i32_0 = arith.constant 0 : i32
    return %arg0, %c0_i32 : i32, i32
  }
  func.func @transform_8(%arg0: i32) -> (i32, i32) {
    %c0_i32 = arith.constant 0 : i32
    %c0_i32_0 = arith.constant 0 : i32
    return %arg0, %c0_i32 : i32, i32
  }
  func.func @transform_9(%arg0: i32) -> (i32, i32) {
    %c0_i32 = arith.constant 0 : i32
    %c0_i32_0 = arith.constant 0 : i32
    return %arg0, %c0_i32 : i32, i32
  }
  func.func @transform_10(%arg0: i32) -> (i32, i32) {
    %c0_i32 = arith.constant 0 : i32
    %c0_i32_0 = arith.constant 0 : i32
    return %arg0, %c0_i32 : i32, i32
  }
  func.func @transform_11(%arg0: i32) -> (i32, i32) {
    %c0_i32 = arith.constant 0 : i32
    %c0_i32_0 = arith.constant 0 : i32
    return %arg0, %c0_i32 : i32, i32
  }
}

</mosaic_0001>

<llo_original>
// kernel: tpu_custom_call.1
$region0: #{tpu_custom_call.1}
  #allocation0 [shape = 'u32[]', space=smem, size = 0x4, offset = 0x4, fixed_abs, tag = 'smem constant byte address 0x4 - core index']
  #allocation1 [shape = 'u32[72,128]{1,0:T(1,128)}', space=vmem, size = 0x9000, scoped, tag = 'internal scratch']
  %s0 = inlined_call_operand.hbm [shape: f32[8,128], index: 0, kind: input, shape index: {}]
  %s1 = inlined_call_operand.hbm [shape: f32[8,128], index: 1, kind: input, shape index: {}]
  %s2 = inlined_call_operand.hbm [shape: f32[8,128], index: 2, kind: input, shape index: {}]
  %s3 = inlined_call_operand.hbm [shape: f32[8,128], index: 3, kind: input, shape index: {}]
  %s4 = inlined_call_operand.hbm [shape: f32[128,128], index: 4, kind: input, shape index: {}]
  %s5 = inlined_call_operand.hbm [shape: f32[128,128], index: 5, kind: input, shape index: {}]
  %s6 = inlined_call_operand.hbm [shape: f32[8,128], index: 6, kind: output, shape index: {0}]
  %s7 = inlined_call_operand.hbm [shape: f32[8,128], index: 7, kind: output, shape index: {1}]
  %s8 = inlined_call_operand.hbm [shape: f32[8,128], index: 8, kind: output, shape index: {2}]
  %s9 = inlined_call_operand.hbm [shape: f32[8,128], index: 9, kind: output, shape index: {3}]
  %s10 = inlined_call_operand.hbm [shape: f32[8,128], index: 10, kind: output, shape index: {4}]
  %s11 = inlined_call_operand.hbm [shape: f32[8,128], index: 11, kind: output, shape index: {5}]
  %12 = xla_tuple %s6, %s7, %s8, %s9, %s10, %s11
  %s13 = sld [smem:[#allocation0]]
  $region98: #{tpu_custom_call.1} parent=0
    _
  %s15 = ssub.s32 1, %s13
  %s16 = scalar_select 0, %s15, %s13
  $region1: #{tpu_custom_call.1} parent=0
    #allocation2 [shape = 'u8[4096]{0}', space=vmem, size = 0x1000, scoped, tag = 'input window, operand 0, single buffered']
    #allocation3 [shape = 's32[1]{0}', space=sflag, size = 0x4, scoped, tag = 'scoped memory for tpu_custom_call.1']
    #allocation4 [shape = 's32[1]{0}', space=sflag, size = 0x4, scoped, tag = 'scoped memory for tpu_custom_call.1']
    #allocation5 [shape = 'u8[4096]{0}', space=vmem, size = 0x1000, scoped, tag = 'input window, operand 1, single buffered']
    #allocation6 [shape = 's32[1]{0}', space=sflag, size = 0x4, scoped, tag = 'scoped memory for tpu_custom_call.1']
    #allocation7 [shape = 'u8[4096]{0}', space=vmem, size = 0x1000, scoped, tag = 'input window, operand 2, single buffered']
    #allocation8 [shape = 'u8[4096]{0}', space=vmem, size = 0x1000, scoped, tag = 'input window, operand 3, single buffered']
    #allocation9 [shape = 's32[1]{0}', space=sflag, size = 0x4, scoped, tag = 'scoped memory for tpu_custom_call.1']
    #allocation10 [shape = 'u8[65536]{0}', space=vmem, size = 0x10000, scoped, tag = 'input window, operand 4, single buffered']
    #allocation11 [shape = 'u8[65536]{0}', space=vmem, size = 0x10000, scoped, tag = 'input window, operand 5, single buffered']
    #allocation12 [shape = 's32[1]{0}', space=sflag, size = 0x4, scoped, tag = 'scoped memory for tpu_custom_call.1']
    #allocation13 [shape = 'u8[4096]{0}', space=vmem, size = 0x1000, scoped, tag = 'output window, operand 0, single buffered']
    #allocation14 [shape = 'u8[4096]{0}', space=vmem, size = 0x1000, scoped, tag = 'output window, operand 1, single buffered']
    #allocation15 [shape = 's32[1]{0}', space=sflag, size = 0x4, scoped, tag = 'scoped memory for tpu_custom_call.1']
    #allocation16 [shape = 'u8[4096]{0}', space=vmem, size = 0x1000, scoped, tag = 'output window, operand 2, single buffered']
    #allocation17 [shape = 'u8[4096]{0}', space=vmem, size = 0x1000, scoped, tag = 'output window, operand 3, single buffered']
    #allocation18 [shape = 's32[1]{0}', space=sflag, size = 0x4, scoped, tag = 'scoped memory for tpu_custom_call.1']
    #allocation19 [shape = 'u8[4096]{0}', space=vmem, size = 0x1000, scoped, tag = 'output window, operand 4, single buffered']
    #allocation20 [shape = 'u8[4096]{0}', space=vmem, size = 0x1000, scoped, tag = 'output window, operand 5, single buffered']
    #allocation21 [shape = 's32[1]{0}', space=sflag, size = 0x4, scoped, tag = 'scoped memory for tpu_custom_call.1']
    %17 = vsyncpa [#allocation3], 0
    %18 = vsyncpa [#allocation6], 0
    %19 = vsyncpa [#allocation9], 0
    %20 = vsyncpa [#allocation12], 0
    %21 = vsyncpa [#allocation4], 0
    %22 = vsyncpa [#allocation15], 0
    %23 = vsyncpa [#allocation18], 0
    %24 = vsyncpa [#allocation21], 0
    // Predicated region
    $region2: #{tpu_custom_call.1} parent=1 // pred_check
      _
    $region3: #{tpu_custom_call.1} parent=1 // pred_check_branch
      %26 = sbr.rel (0) target = $region5
    $region4: #{tpu_custom_call.1} parent=1 // pred_region
      %28 = vsyncadd [#allocation3], 0
      %s30 = sshll.u32 %s0, 4
      %s31 = int_to_ptr.hbm [resolvable:$true] %s30
      %s32 = sshll.u32 [#allocation2], 4
      %s33 = int_to_ptr.vmem [resolvable:$true] %s32
      %35 = dma.hbm_to_vmem [thread:$0]  %s31, 128, %s33, [#allocation3]
    $region5: #{tpu_custom_call.1} parent=1 // pred_fallthru
      _
    // Predicated region
    $region6: #{tpu_custom_call.1} parent=1 // pred_check
      _
    $region7: #{tpu_custom_call.1} parent=1 // pred_check_branch
      %37 = sbr.rel (0) target = $region9
    $region8: #{tpu_custom_call.1} parent=1 // pred_region
      %39 = vsyncadd [#allocation6], 0
      %s41 = sshll.u32 %s1, 4
      %s42 = int_to_ptr.hbm [resolvable:$true] %s41
      %s43 = sshll.u32 [#allocation5], 4
      %s44 = int_to_ptr.vmem [resolvable:$true] %s43
      %46 = dma.hbm_to_vmem [thread:$0]  %s42, 128, %s44, [#allocation6]
    $region9: #{tpu_custom_call.1} parent=1 // pred_fallthru
      _
    // Predicated region
    $region10: #{tpu_custom_call.1} parent=1 // pred_check
      _
    $region11: #{tpu_custom_call.1} parent=1 // pred_check_branch
      %48 = sbr.rel (0) target = $region13
    $region12: #{tpu_custom_call.1} parent=1 // pred_region
      %50 = vsyncadd [#allocation6], 0
      %s52 = sshll.u32 %s2, 4
      %s53 = int_to_ptr.hbm [resolvable:$true] %s52
      %s54 = sshll.u32 [#allocation7], 4
      %s55 = int_to_ptr.vmem [resolvable:$true] %s54
      %57 = dma.hbm_to_vmem [thread:$0]  %s53, 128, %s55, [#allocation6]
    $region13: #{tpu_custom_call.1} parent=1 // pred_fallthru
      _
    // Predicated region
    $region14: #{tpu_custom_call.1} parent=1 // pred_check
      _
    $region15: #{tpu_custom_call.1} parent=1 // pred_check_branch
      %59 = sbr.rel (0) target = $region17
    $region16: #{tpu_custom_call.1} parent=1 // pred_region
      %61 = vsyncadd [#allocation9], 0
      %s63 = sshll.u32 %s3, 4
      %s64 = int_to_ptr.hbm [resolvable:$true] %s63
      %s65 = sshll.u32 [#allocation8], 4
      %s66 = int_to_ptr.vmem [resolvable:$true] %s65
      %68 = dma.hbm_to_vmem [thread:$0]  %s64, 128, %s66, [#allocation9]
    $region17: #{tpu_custom_call.1} parent=1 // pred_fallthru
      _
    // Predicated region
    $region18: #{tpu_custom_call.1} parent=1 // pred_check
      _
    $region19: #{tpu_custom_call.1} parent=1 // pred_check_branch
      %70 = sbr.rel (0) target = $region21
    $region20: #{tpu_custom_call.1} parent=1 // pred_region
      %72 = vsyncadd [#allocation9], 0
      %s73 = sshll.u32 %s4, 4
      %s74 = int_to_ptr.hbm [resolvable:$true] %s73
      %s75 = sshll.u32 [#allocation10], 4
      %s76 = int_to_ptr.vmem [resolvable:$true] %s75
      %81 = dma.hbm_to_vmem [thread:$0]  %s74, 2048, %s76, [#allocation9], 128, 128, 8
    $region21: #{tpu_custom_call.1} parent=1 // pred_fallthru
      _
    // Predicated region
    $region22: #{tpu_custom_call.1} parent=1 // pred_check
      _
    $region23: #{tpu_custom_call.1} parent=1 // pred_check_branch
      %83 = sbr.rel (0) target = $region25
    $region24: #{tpu_custom_call.1} parent=1 // pred_region
      %85 = vsyncadd [#allocation12], 0
      %s86 = sshll.u32 %s5, 4
      %s87 = int_to_ptr.hbm [resolvable:$true] %s86
      %s88 = sshll.u32 [#allocation11], 4
      %s89 = int_to_ptr.vmem [resolvable:$true] %s88
      %94 = dma.hbm_to_vmem [thread:$0]  %s87, 2048, %s89, [#allocation12], 128, 128, 8
    $region25: #{tpu_custom_call.1} parent=1 // pred_fallthru
      _
    // Predicated region
    $region26: #{tpu_custom_call.1} parent=1 // pred_check
      _
    $region27: #{tpu_custom_call.1} parent=1 // pred_check_branch
      %96 = sbr.rel (0) target = $region29
    $region28: #{tpu_custom_call.1} parent=1 // pred_region
      %98 = dma.done [#allocation3], 128
    $region29: #{tpu_custom_call.1} parent=1 // pred_fallthru
      _
    // Predicated region
    $region30: #{tpu_custom_call.1} parent=1 // pred_check
      _
    $region31: #{tpu_custom_call.1} parent=1 // pred_check_branch
      %100 = sbr.rel (0) target = $region33
    $region32: #{tpu_custom_call.1} parent=1 // pred_region
      %102 = dma.done [#allocation6], 128
    $region33: #{tpu_custom_call.1} parent=1 // pred_fallthru
      _
    // Predicated region
    $region34: #{tpu_custom_call.1} parent=1 // pred_check
      _
    $region35: #{tpu_custom_call.1} parent=1 // pred_check_branch
      %104 = sbr.rel (0) target = $region37
    $region36: #{tpu_custom_call.1} parent=1 // pred_region
      %106 = dma.done [#allocation6], 128
    $region37: #{tpu_custom_call.1} parent=1 // pred_fallthru
      _
    // Predicated region
    $region38: #{tpu_custom_call.1} parent=1 // pred_check
      _
    $region39: #{tpu_custom_call.1} parent=1 // pred_check_branch
      %108 = sbr.rel (0) target = $region41
    $region40: #{tpu_custom_call.1} parent=1 // pred_region
      %110 = dma.done [#allocation9], 128
    $region41: #{tpu_custom_call.1} parent=1 // pred_fallthru
      _
    // Predicated region
    $region42: #{tpu_custom_call.1} parent=1 // pred_check
      _
    $region43: #{tpu_custom_call.1} parent=1 // pred_check_branch
      %112 = sbr.rel (0) target = $region45
    $region44: #{tpu_custom_call.1} parent=1 // pred_region
      %114 = dma.done [#allocation9], 2048
    $region45: #{tpu_custom_call.1} parent=1 // pred_fallthru
      _
    // Predicated region
    $region46: #{tpu_custom_call.1} parent=1 // pred_check
      _
    $region47: #{tpu_custom_call.1} parent=1 // pred_check_branch
      %116 = sbr.rel (0) target = $region49
    $region48: #{tpu_custom_call.1} parent=1 // pred_region
      %118 = dma.done [#allocation12], 2048
    $region49: #{tpu_custom_call.1} parent=1 // pred_fallthru
      _
    %v119 = vld [vmem:[#allocation10] sm:$0xff]
    %v120 = vld [vmem:[#allocation10 + $0x8] sm:$0xff]
    %v121 = vld [vmem:[#allocation10 + $0x10] sm:$0xff]
    %v122 = vld [vmem:[#allocation10 + $0x18] sm:$0xff]
    %v123 = vld [vmem:[#allocation10 + $0x20] sm:$0xff]
    %v124 = vld [vmem:[#allocation10 + $0x28] sm:$0xff]
    %v125 = vld [vmem:[#allocation10 + $0x30] sm:$0xff]
    %v126 = vld [vmem:[#allocation10 + $0x38] sm:$0xff]
    %v127 = vld [vmem:[#allocation10 + $0x40] sm:$0xff]
    %v128 = vld [vmem:[#allocation10 + $0x48] sm:$0xff]
    %v129 = vld [vmem:[#allocation10 + $0x50] sm:$0xff]
    %v130 = vld [vmem:[#allocation10 + $0x58] sm:$0xff]
    %v131 = vld [vmem:[#allocation10 + $0x60] sm:$0xff]
    %v132 = vld [vmem:[#allocation10 + $0x68] sm:$0xff]
    %v133 = vld [vmem:[#allocation10 + $0x70] sm:$0xff]
    %v134 = vld [vmem:[#allocation10 + $0x78] sm:$0xff]
    %v135 = vld [vmem:[#allocation11] sm:$0xff]
    %v136 = vld [vmem:[#allocation11 + $0x8] sm:$0xff]
    %v137 = vld [vmem:[#allocation11 + $0x10] sm:$0xff]
    %v138 = vld [vmem:[#allocation11 + $0x18] sm:$0xff]
    %v139 = vld [vmem:[#allocation11 + $0x20] sm:$0xff]
    %v140 = vld [vmem:[#allocation11 + $0x28] sm:$0xff]
    %v141 = vld [vmem:[#allocation11 + $0x30] sm:$0xff]
    %v142 = vld [vmem:[#allocation11 + $0x38] sm:$0xff]
    %v143 = vld [vmem:[#allocation11 + $0x40] sm:$0xff]
    %v144 = vld [vmem:[#allocation11 + $0x48] sm:$0xff]
    %v145 = vld [vmem:[#allocation11 + $0x50] sm:$0xff]
    %v146 = vld [vmem:[#allocation11 + $0x58] sm:$0xff]
    %v147 = vld [vmem:[#allocation11 + $0x60] sm:$0xff]
    %v148 = vld [vmem:[#allocation11 + $0x68] sm:$0xff]
    %v149 = vld [vmem:[#allocation11 + $0x70] sm:$0xff]
    %v150 = vld [vmem:[#allocation11 + $0x78] sm:$0xff]
    %v151 = vld [vmem:[#allocation2] sm:$0xff]
    %152 = vmax.xlane.f32.xlu0 %v151
    %v153 = vpop.xlane.xlu0 %152
    %v154 = vsub.f32 %v151, %v153
    %v155 = vmul.f32 %v154, 1.442695
    %v156 = vpow.pop %v155
    %157 = vmatpush.msra.mxu0 %v150
    %158 = vmatpush.msra.mxu0 %v149
    %159 = vmatpush.msra.mxu0 %v148
    %160 = vmatpush.msra.mxu0 %v147
    %161 = vmatpush.msra.mxu0 %v146
    %162 = vmatpush.msra.mxu0 %v145
    %163 = vmatpush.msra.mxu0 %v144
    %164 = vmatpush.msra.mxu0 %v143
    %165 = vmatpush.msra.mxu0 %v142
    %166 = vmatpush.msra.mxu0 %v141
    %167 = vmatpush.msra.mxu0 %v140
    %168 = vmatpush.msra.mxu0 %v139
    %169 = vmatpush.msra.mxu0 %v138
    %170 = vmatpush.msra.mxu0 %v137
    %171 = vmatpush.msra.mxu0 %v136
    %172 = vmatpush.msra.mxu0 %v135
    %173 = vmatmul.f32.gmra.mxu0 %v156
    %v174 = vpop.f32.mrf.mxu0
    %v175 = vadd.f32 0.0, %v174
    %176 = vdwg.mxu0
    %v177 = vlog2.pop %v175
    %v178 = vmul.f32 %v177, 0.6931472
    %v179 = vsub.f32 %v154, %v178
    %180 = vst [vmem:[#allocation13] sm:$0xff] %v179
    %181 = vmatpush.msra.mxu0 %v134
    %182 = vmatpush.msra.mxu0 %v133
    %183 = vmatpush.msra.mxu0 %v132
    %184 = vmatpush.msra.mxu0 %v131
    %185 = vmatpush.msra.mxu0 %v130
    %186 = vmatpush.msra.mxu0 %v129
    %187 = vmatpush.msra.mxu0 %v128
    %188 = vmatpush.msra.mxu0 %v127
    %189 = vmatpush.msra.mxu0 %v126
    %190 = vmatpush.msra.mxu0 %v125
    %191 = vmatpush.msra.mxu0 %v124
    %192 = vmatpush.msra.mxu0 %v123
    %193 = vmatpush.msra.mxu0 %v122
    %194 = vmatpush.msra.mxu0 %v121
    %195 = vmatpush.msra.mxu0 %v120
    %196 = vmatpush.msra.mxu0 %v119
    %197 = vmatmul.f32.gmra.mxu0 %v151
    %v198 = vpop.f32.mrf.mxu0
    %v199 = vadd.f32 0.0, %v198
    %200 = vdwg.mxu0
    %v201 = vld [vmem:[#allocation5] sm:$0xff]
    %202 = vmax.xlane.f32.xlu0 %v201
    %v203 = vpop.xlane.xlu0 %202
    %v204 = vsub.f32 %v201, %v203
    %v205 = vmul.f32 %v204, 1.442695
    %v206 = vpow.pop %v205
    %207 = vmatpush.msra.mxu0 %v150
    %208 = vmatpush.msra.mxu0 %v149
    %209 = vmatpush.msra.mxu0 %v148
    %210 = vmatpush.msra.mxu0 %v147
    %211 = vmatpush.msra.mxu0 %v146
    %212 = vmatpush.msra.mxu0 %v145
    %213 = vmatpush.msra.mxu0 %v144
    %214 = vmatpush.msra.mxu0 %v143
    %215 = vmatpush.msra.mxu0 %v142
    %216 = vmatpush.msra.mxu0 %v141
    %217 = vmatpush.msra.mxu0 %v140
    %218 = vmatpush.msra.mxu0 %v139
    %219 = vmatpush.msra.mxu0 %v138
    %220 = vmatpush.msra.mxu0 %v137
    %221 = vmatpush.msra.mxu0 %v136
    %222 = vmatpush.msra.mxu0 %v135
    %223 = vmatmul.f32.gmra.mxu0 %v206
    %v224 = vpop.f32.mrf.mxu0
    %v225 = vadd.f32 0.0, %v224
    %226 = vdwg.mxu0
    %v227 = vlog2.pop %v225
    %v228 = vmul.f32 %v227, 0.6931472
    %v229 = vsub.f32 %v204, %v228
    %230 = vst [vmem:[#allocation14] sm:$0xff] %v229
    %231 = vmatpush.msra.mxu0 %v134
    %232 = vmatpush.msra.mxu0 %v133
    %233 = vmatpush.msra.mxu0 %v132
    %234 = vmatpush.msra.mxu0 %v131
    %235 = vmatpush.msra.mxu0 %v130
    %236 = vmatpush.msra.mxu0 %v129
    %237 = vmatpush.msra.mxu0 %v128
    %238 = vmatpush.msra.mxu0 %v127
    %239 = vmatpush.msra.mxu0 %v126
    %240 = vmatpush.msra.mxu0 %v125
    %241 = vmatpush.msra.mxu0 %v124
    %242 = vmatpush.msra.mxu0 %v123
    %243 = vmatpush.msra.mxu0 %v122
    %244 = vmatpush.msra.mxu0 %v121
    %245 = vmatpush.msra.mxu0 %v120
    %246 = vmatpush.msra.mxu0 %v119
    %247 = vmatmul.f32.gmra.mxu0 %v201
    %v248 = vpop.f32.mrf.mxu0
    %v249 = vadd.f32 0.0, %v248
    %250 = vdwg.mxu0
    %v251 = vmul.f32 %v199, %v249
    %v252 = vld [vmem:[#allocation7] sm:$0xff]
    %253 = vmax.xlane.f32.xlu0 %v252
    %v254 = vpop.xlane.xlu0 %253
    %v255 = vsub.f32 %v252, %v254
    %v256 = vmul.f32 %v255, 1.442695
    %v257 = vpow.pop %v256
    %258 = vmatpush.msra.mxu0 %v150
    %259 = vmatpush.msra.mxu0 %v149
    %260 = vmatpush.msra.mxu0 %v148
    %261 = vmatpush.msra.mxu0 %v147
    %262 = vmatpush.msra.mxu0 %v146
    %263 = vmatpush.msra.mxu0 %v145
    %264 = vmatpush.msra.mxu0 %v144
    %265 = vmatpush.msra.mxu0 %v143
    %266 = vmatpush.msra.mxu0 %v142
    %267 = vmatpush.msra.mxu0 %v141
    %268 = vmatpush.msra.mxu0 %v140
    %269 = vmatpush.msra.mxu0 %v139
    %270 = vmatpush.msra.mxu0 %v138
    %271 = vmatpush.msra.mxu0 %v137
    %272 = vmatpush.msra.mxu0 %v136
    %273 = vmatpush.msra.mxu0 %v135
    %274 = vmatmul.f32.gmra.mxu0 %v257
    %v275 = vpop.f32.mrf.mxu0
    %v276 = vadd.f32 0.0, %v275
    %277 = vdwg.mxu0
    %v278 = vlog2.pop %v276
    %v279 = vmul.f32 %v278, 0.6931472
    %v280 = vsub.f32 %v255, %v279
    %281 = vst [vmem:[#allocation16] sm:$0xff] %v280
    %v282 = vld [vmem:[#allocation8] sm:$0xff]
    %283 = vmax.xlane.f32.xlu0 %v282
    %v284 = vpop.xlane.xlu0 %283
    %v285 = vsub.f32 %v282, %v284
    %v286 = vmul.f32 %v285, 1.442695
    %v287 = vpow.pop %v286
    %288 = vmatpush.msra.mxu0 %v150
    %289 = vmatpush.msra.mxu0 %v149
    %290 = vmatpush.msra.mxu0 %v148
    %291 = vmatpush.msra.mxu0 %v147
    %292 = vmatpush.msra.mxu0 %v146
    %293 = vmatpush.msra.mxu0 %v145
    %294 = vmatpush.msra.mxu0 %v144
    %295 = vmatpush.msra.mxu0 %v143
    %296 = vmatpush.msra.mxu0 %v142
    %297 = vmatpush.msra.mxu0 %v141
    %298 = vmatpush.msra.mxu0 %v140
    %299 = vmatpush.msra.mxu0 %v139
    %300 = vmatpush.msra.mxu0 %v138
    %301 = vmatpush.msra.mxu0 %v137
    %302 = vmatpush.msra.mxu0 %v136
    %303 = vmatpush.msra.mxu0 %v135
    %304 = vmatmul.f32.gmra.mxu0 %v287
    %v305 = vpop.f32.mrf.mxu0
    %v306 = vadd.f32 0.0, %v305
    %307 = vdwg.mxu0
    %v308 = vlog2.pop %v306
    %v309 = vmul.f32 %v308, 0.6931472
    %v310 = vsub.f32 %v285, %v309
    %311 = vst [vmem:[#allocation17] sm:$0xff] %v310
    %v312 = vmul.f32 %v251, 0.0625
    %v313 = vld [vmem:[#allocation7] sm:$0xff]
    %314 = vmatpush.msra.mxu0 %v134
    %315 = vmatpush.msra.mxu0 %v133
    %316 = vmatpush.msra.mxu0 %v132
    %317 = vmatpush.msra.mxu0 %v131
    %318 = vmatpush.msra.mxu0 %v130
    %319 = vmatpush.msra.mxu0 %v129
    %320 = vmatpush.msra.mxu0 %v128
    %321 = vmatpush.msra.mxu0 %v127
    %322 = vmatpush.msra.mxu0 %v126
    %323 = vmatpush.msra.mxu0 %v125
    %324 = vmatpush.msra.mxu0 %v124
    %325 = vmatpush.msra.mxu0 %v123
    %326 = vmatpush.msra.mxu0 %v122
    %327 = vmatpush.msra.mxu0 %v121
    %328 = vmatpush.msra.mxu0 %v120
    %329 = vmatpush.msra.mxu0 %v119
    %330 = vmatmul.f32.gmra.mxu0 %v313
    %v331 = vpop.f32.mrf.mxu0
    %v332 = vadd.f32 0.0, %v331
    %333 = vdwg.mxu0
    %v334 = vmul.f32 %v312, %v332
    %335 = vmatpush.msra.mxu0 %v134
    %336 = vmatpush.msra.mxu0 %v133
    %337 = vmatpush.msra.mxu0 %v132
    %338 = vmatpush.msra.mxu0 %v131
    %339 = vmatpush.msra.mxu0 %v130
    %340 = vmatpush.msra.mxu0 %v129
    %341 = vmatpush.msra.mxu0 %v128
    %342 = vmatpush.msra.mxu0 %v127
    %343 = vmatpush.msra.mxu0 %v126
    %344 = vmatpush.msra.mxu0 %v125
    %345 = vmatpush.msra.mxu0 %v124
    %346 = vmatpush.msra.mxu0 %v123
    %347 = vmatpush.msra.mxu0 %v122
    %348 = vmatpush.msra.mxu0 %v121
    %349 = vmatpush.msra.mxu0 %v120
    %350 = vmatpush.msra.mxu0 %v119
    %351 = vmatmul.f32.gmra.mxu0 %v334
    %v352 = vpop.f32.mrf.mxu0
    %v353 = vadd.f32 0.0, %v352
    %354 = vdwg.mxu0
    %355 = vmax.xlane.f32.xlu0 %v353
    %v356 = vpop.xlane.xlu0 %355
    %v357 = vsub.f32 %v353, %v356
    %v358 = vmul.f32 %v357, 1.442695
    %v359 = vpow.pop %v358
    %360 = vmatpush.msra.mxu0 %v150
    %361 = vmatpush.msra.mxu0 %v149
    %362 = vmatpush.msra.mxu0 %v148
    %363 = vmatpush.msra.mxu0 %v147
    %364 = vmatpush.msra.mxu0 %v146
    %365 = vmatpush.msra.mxu0 %v145
    %366 = vmatpush.msra.mxu0 %v144
    %367 = vmatpush.msra.mxu0 %v143
    %368 = vmatpush.msra.mxu0 %v142
    %369 = vmatpush.msra.mxu0 %v141
    %370 = vmatpush.msra.mxu0 %v140
    %371 = vmatpush.msra.mxu0 %v139
    %372 = vmatpush.msra.mxu0 %v138
    %373 = vmatpush.msra.mxu0 %v137
    %374 = vmatpush.msra.mxu0 %v136
    %375 = vmatpush.msra.mxu0 %v135
    %376 = vmatmul.f32.gmra.mxu0 %v359
    %v377 = vpop.f32.mrf.mxu0
    %v378 = vadd.f32 0.0, %v377
    %379 = vdwg.mxu0
    %v380 = vlog2.pop %v378
    %v381 = vmul.f32 %v380, 0.6931472
    %v382 = vsub.f32 %v357, %v381
    %383 = vst [vmem:[#allocation19] sm:$0xff] %v382
    %v384 = vld [vmem:[#allocation8] sm:$0xff]
    %385 = vmatpush.msra.mxu0 %v134
    %386 = vmatpush.msra.mxu0 %v133
    %387 = vmatpush.msra.mxu0 %v132
    %388 = vmatpush.msra.mxu0 %v131
    %389 = vmatpush.msra.mxu0 %v130
    %390 = vmatpush.msra.mxu0 %v129
    %391 = vmatpush.msra.mxu0 %v128
    %392 = vmatpush.msra.mxu0 %v127
    %393 = vmatpush.msra.mxu0 %v126
    %394 = vmatpush.msra.mxu0 %v125
    %395 = vmatpush.msra.mxu0 %v124
    %396 = vmatpush.msra.mxu0 %v123
    %397 = vmatpush.msra.mxu0 %v122
    %398 = vmatpush.msra.mxu0 %v121
    %399 = vmatpush.msra.mxu0 %v120
    %400 = vmatpush.msra.mxu0 %v119
    %401 = vmatmul.f32.gmra.mxu0 %v384
    %v402 = vpop.f32.mrf.mxu0
    %v403 = vadd.f32 0.0, %v402
    %404 = vdwg.mxu0
    %v405 = vmul.f32 %v312, %v403
    %406 = vmatpush.msra.mxu0 %v134
    %407 = vmatpush.msra.mxu0 %v133
    %408 = vmatpush.msra.mxu0 %v132
    %409 = vmatpush.msra.mxu0 %v131
    %410 = vmatpush.msra.mxu0 %v130
    %411 = vmatpush.msra.mxu0 %v129
    %412 = vmatpush.msra.mxu0 %v128
    %413 = vmatpush.msra.mxu0 %v127
    %414 = vmatpush.msra.mxu0 %v126
    %415 = vmatpush.msra.mxu0 %v125
    %416 = vmatpush.msra.mxu0 %v124
    %417 = vmatpush.msra.mxu0 %v123
    %418 = vmatpush.msra.mxu0 %v122
    %419 = vmatpush.msra.mxu0 %v121
    %420 = vmatpush.msra.mxu0 %v120
    %421 = vmatpush.msra.mxu0 %v119
    %422 = vmatmul.f32.gmra.mxu0 %v405
    %v423 = vpop.f32.mrf.mxu0
    %v424 = vadd.f32 0.0, %v423
    %425 = vdwg.mxu0
    %426 = vmax.xlane.f32.xlu0 %v424
    %v427 = vpop.xlane.xlu0 %426
    %v428 = vsub.f32 %v424, %v427
    %v429 = vmul.f32 %v428, 1.442695
    %v430 = vpow.pop %v429
    %431 = vmatpush.msra.mxu0 %v150
    %432 = vmatpush.msra.mxu0 %v149
    %433 = vmatpush.msra.mxu0 %v148
    %434 = vmatpush.msra.mxu0 %v147
    %435 = vmatpush.msra.mxu0 %v146
    %436 = vmatpush.msra.mxu0 %v145
    %437 = vmatpush.msra.mxu0 %v144
    %438 = vmatpush.msra.mxu0 %v143
    %439 = vmatpush.msra.mxu0 %v142
    %440 = vmatpush.msra.mxu0 %v141
    %441 = vmatpush.msra.mxu0 %v140
    %442 = vmatpush.msra.mxu0 %v139
    %443 = vmatpush.msra.mxu0 %v138
    %444 = vmatpush.msra.mxu0 %v137
    %445 = vmatpush.msra.mxu0 %v136
    %446 = vmatpush.msra.mxu0 %v135
    %447 = vmatmul.f32.gmra.mxu0 %v430
    %v448 = vpop.f32.mrf.mxu0
    %v449 = vadd.f32 0.0, %v448
    %450 = vdwg.mxu0
    %v451 = vlog2.pop %v449
    %v452 = vmul.f32 %v451, 0.6931472
    %v453 = vsub.f32 %v428, %v452
    %454 = vst [vmem:[#allocation20] sm:$0xff] %v453
    // Predicated region
    $region50: #{tpu_custom_call.1} parent=1 // pred_check
      _
    $region51: #{tpu_custom_call.1} parent=1 // pred_check_branch
      %456 = sbr.rel (0) target = $region53
    $region52: #{tpu_custom_call.1} parent=1 // pred_region
      %458 = vsyncadd [#allocation4], 0
      %s460 = sshll.u32 [#allocation13], 4
      %s461 = int_to_ptr.vmem [resolvable:$true] %s460
      %s462 = sshll.u32 %s6, 4
      %s463 = int_to_ptr.hbm [resolvable:$true] %s462
      %465 = dma.vmem_to_hbm [thread:$0]  %s461, 128, %s463, [#allocation4]
    $region53: #{tpu_custom_call.1} parent=1 // pred_fallthru
      _
    // Predicated region
    $region54: #{tpu_custom_call.1} parent=1 // pred_check
      _
    $region55: #{tpu_custom_call.1} parent=1 // pred_check_branch
      %467 = sbr.rel (0) target = $region57
    $region56: #{tpu_custom_call.1} parent=1 // pred_region
      %469 = vsyncadd [#allocation15], 0
      %s471 = sshll.u32 [#allocation14], 4
      %s472 = int_to_ptr.vmem [resolvable:$true] %s471
      %s473 = sshll.u32 %s7, 4
      %s474 = int_to_ptr.hbm [resolvable:$true] %s473
      %476 = dma.vmem_to_hbm [thread:$0]  %s472, 128, %s474, [#allocation15]
    $region57: #{tpu_custom_call.1} parent=1 // pred_fallthru
      _
    // Predicated region
    $region58: #{tpu_custom_call.1} parent=1 // pred_check
      _
    $region59: #{tpu_custom_call.1} parent=1 // pred_check_branch
      %478 = sbr.rel (0) target = $region61
    $region60: #{tpu_custom_call.1} parent=1 // pred_region
      %480 = vsyncadd [#allocation15], 0
      %s482 = sshll.u32 [#allocation16], 4
      %s483 = int_to_ptr.vmem [resolvable:$true] %s482
      %s484 = sshll.u32 %s8, 4
      %s485 = int_to_ptr.hbm [resolvable:$true] %s484
      %487 = dma.vmem_to_hbm [thread:$0]  %s483, 128, %s485, [#allocation15]
    $region61: #{tpu_custom_call.1} parent=1 // pred_fallthru
      _
    // Predicated region
    $region62: #{tpu_custom_call.1} parent=1 // pred_check
      _
    $region63: #{tpu_custom_call.1} parent=1 // pred_check_branch
      %489 = sbr.rel (0) target = $region65
    $region64: #{tpu_custom_call.1} parent=1 // pred_region
      %491 = vsyncadd [#allocation18], 0
      %s493 = sshll.u32 [#allocation17], 4
      %s494 = int_to_ptr.vmem [resolvable:$true] %s493
      %s495 = sshll.u32 %s9, 4
      %s496 = int_to_ptr.hbm [resolvable:$true] %s495
      %498 = dma.vmem_to_hbm [thread:$0]  %s494, 128, %s496, [#allocation18]
    $region65: #{tpu_custom_call.1} parent=1 // pred_fallthru
      _
    // Predicated region
    $region66: #{tpu_custom_call.1} parent=1 // pred_check
      _
    $region67: #{tpu_custom_call.1} parent=1 // pred_check_branch
      %500 = sbr.rel (0) target = $region69
    $region68: #{tpu_custom_call.1} parent=1 // pred_region
      %502 = vsyncadd [#allocation18], 0
      %s504 = sshll.u32 [#allocation19], 4
      %s505 = int_to_ptr.vmem [resolvable:$true] %s504
      %s506 = sshll.u32 %s10, 4
      %s507 = int_to_ptr.hbm [resolvable:$true] %s506
      %509 = dma.vmem_to_hbm [thread:$0]  %s505, 128, %s507, [#allocation18]
    $region69: #{tpu_custom_call.1} parent=1 // pred_fallthru
      _
    // Predicated region
    $region70: #{tpu_custom_call.1} parent=1 // pred_check
      _
    $region71: #{tpu_custom_call.1} parent=1 // pred_check_branch
      %511 = sbr.rel (0) target = $region73
    $region72: #{tpu_custom_call.1} parent=1 // pred_region
      %513 = vsyncadd [#allocation21], 0
      %s515 = sshll.u32 [#allocation20], 4
      %s516 = int_to_ptr.vmem [resolvable:$true] %s515
      %s517 = sshll.u32 %s11, 4
      %s518 = int_to_ptr.hbm [resolvable:$true] %s517
      %520 = dma.vmem_to_hbm [thread:$0]  %s516, 128, %s518, [#allocation21]
    $region73: #{tpu_custom_call.1} parent=1 // pred_fallthru
      _
    // Predicated region
    $region74: #{tpu_custom_call.1} parent=1 // pred_check
      _
    $region75: #{tpu_custom_call.1} parent=1 // pred_check_branch
      %522 = sbr.rel (0) target = $region77
    $region76: #{tpu_custom_call.1} parent=1 // pred_region
      %524 = dma.done [#allocation4], 128
    $region77: #{tpu_custom_call.1} parent=1 // pred_fallthru
      _
    // Predicated region
    $region78: #{tpu_custom_call.1} parent=1 // pred_check
      _
    $region79: #{tpu_custom_call.1} parent=1 // pred_check_branch
      %526 = sbr.rel (0) target = $region81
    $region80: #{tpu_custom_call.1} parent=1 // pred_region
      %528 = dma.done [#allocation15], 128
    $region81: #{tpu_custom_call.1} parent=1 // pred_fallthru
      _
    // Predicated region
    $region82: #{tpu_custom_call.1} parent=1 // pred_check
      _
    $region83: #{tpu_custom_call.1} parent=1 // pred_check_branch
      %530 = sbr.rel (0) target = $region85
    $region84: #{tpu_custom_call.1} parent=1 // pred_region
      %532 = dma.done [#allocation15], 128
    $region85: #{tpu_custom_call.1} parent=1 // pred_fallthru
      _
    // Predicated region
    $region86: #{tpu_custom_call.1} parent=1 // pred_check
      _
    $region87: #{tpu_custom_call.1} parent=1 // pred_check_branch
      %534 = sbr.rel (0) target = $region89
    $region88: #{tpu_custom_call.1} parent=1 // pred_region
      %536 = dma.done [#allocation18], 128
    $region89: #{tpu_custom_call.1} parent=1 // pred_fallthru
      _
    // Predicated region
    $region90: #{tpu_custom_call.1} parent=1 // pred_check
      _
    $region91: #{tpu_custom_call.1} parent=1 // pred_check_branch
      %538 = sbr.rel (0) target = $region93
    $region92: #{tpu_custom_call.1} parent=1 // pred_region
      %540 = dma.done [#allocation18], 128
    $region93: #{tpu_custom_call.1} parent=1 // pred_fallthru
      _
    // Predicated region
    $region94: #{tpu_custom_call.1} parent=1 // pred_check
      _
    $region95: #{tpu_custom_call.1} parent=1 // pred_check_branch
      %542 = sbr.rel (0) target = $region97
    $region96: #{tpu_custom_call.1} parent=1 // pred_region
      %544 = dma.done [#allocation21], 128
    $region97: #{tpu_custom_call.1} parent=1 // pred_fallthru
      _
    %545 = vsyncpa [#allocation3], 1
    %546 = vsyncpa [#allocation6], 1
    %547 = vsyncpa [#allocation9], 1
    %548 = vsyncpa [#allocation12], 1
    %549 = vsyncpa [#allocation4], 1
    %550 = vsyncpa [#allocation15], 1
    %551 = vsyncpa [#allocation18], 1
    %552 = vsyncpa [#allocation21], 1

</llo_original>
